<compile_context>
chip_gen: v7x
topology: tpu7x:2x2x1
jax: 0.10.0
libtpu: 0.0.40
codegen_flags: <defaults>
</compile_context>

<pallas_src>
import functools

import jax
import jax.numpy as jnp
from jax.experimental import pallas as pl
from jax.experimental.pallas import tpu as pltpu


def _conv_stats_kernel(xf_ref, w_ref, b_ref, mask_ref, y_ref, stats_ref,
                       col_ref, *, Wp):
    """Pass 1: 3x3 conv (single im2col matmul) + per-tile BN partial stats.

    xf_ref   : (1, Cin_p, Lp)   flattened zero-padded input for this batch image
    w_ref    : (Cout, 9*Cin_p)  conv weight, tap-major along K
    b_ref    : (Cout, 1)        conv bias
    mask_ref : (1, L)           1.0 on valid output columns, 0.0 on pad columns
    y_ref    : (1, Cout, L)     pre-BN conv output (flat, padded-width coords)
    stats_ref: (1, Cout, 2)     per-tile [sum, sum_of_squares] over valid pixels
    col_ref  : (9*Cin_p, L)     VMEM scratch: im2col operand
    """
    cin_p = xf_ref.shape[1]
    L = y_ref.shape[-1]

    # Build the im2col operand with 9 per-tap reads straight from the input
    # ref (each tap is a contiguous flat window; offsets are static). Writes
    # land at sublane-aligned offsets because Cin is padded to a multiple of 8.
    for t in range(9):
        dy, dx = divmod(t, 3)
        off = dy * Wp + dx
        col_ref[t * cin_p:(t + 1) * cin_p, :] = xf_ref[0, :, off:off + L]

    # One fused MXU matmul for all 9 taps: (Cout, 9*Cin_p) @ (9*Cin_p, L).
    acc = jnp.dot(w_ref[...], col_ref[...], preferred_element_type=jnp.float32)
    acc = acc + b_ref[...].astype(jnp.float32)              # conv bias
    y_ref[0] = acc.astype(y_ref.dtype)

    # Single-pass partial BN statistics (sum, sum of squares) over the lane
    # axis (XLU cross-lane reduce), with the pad columns masked out.
    accm = acc * mask_ref[...]                               # (Cout, L)
    stats_ref[0, :, 0:1] = jnp.sum(accm, axis=1, keepdims=True)
    stats_ref[0, :, 1:2] = jnp.sum(accm * accm, axis=1, keepdims=True)


def _bn_relu_kernel(y_ref, scale_ref, shift_ref, o_ref):
    """Pass 2: y * scale + shift (folded BN) followed by ReLU."""
    out = jnp.maximum(y_ref[0] * scale_ref[...] + shift_ref[...], 0.0)
    o_ref[0] = out.astype(o_ref.dtype)


def conv_batchnorm_relu(x_nchw, w_oihw, bias, gamma, beta, *, eps=1e-5,
                        matmul_dtype=jnp.float32):
    """PyTorch-semantics ConvBatchNorm forward. x_nchw: (N, Cin, H, W).

    matmul_dtype=jnp.bfloat16 unlocks the full MXU rate on v6e/v7x (f32
    accumulation is kept); default f32 matches the reference to 1e-4.
    """
    N, Cin, H, W = x_nchw.shape
    Cout = w_oihw.shape[0]
    Wp = W + 2
    L = H * Wp                              # flat conv-output length (pad-width coords)
    Cin_p = ((Cin + 7) // 8) * 8            # channel pad -> aligned im2col stores
    Lp = (H + 2) * Wp + 2                   # +2 so the last tap window stays in range
    itemsize = jnp.dtype(matmul_dtype).itemsize

    # ---- glue: channel pad + spatial zero-pad + flatten (no layout transposes) ----
    xp = jnp.pad(x_nchw, ((0, 0), (0, Cin_p - Cin), (1, 1), (1, 1)))
    xf = xp.reshape(N, Cin_p, (H + 2) * Wp)
    xf = jnp.pad(xf, ((0, 0), (0, 0), (0, Lp - (H + 2) * Wp))).astype(matmul_dtype)

    # Weight -> (Cout, 9*Cin_p), K index = (dy*3 + dx)*Cin_p + c.
    w_p = jnp.pad(w_oihw, ((0, 0), (0, Cin_p - Cin), (0, 0), (0, 0)))
    w_all = jnp.transpose(w_p, (0, 2, 3, 1)).reshape(Cout, 9 * Cin_p)
    w_all = w_all.astype(matmul_dtype)
    b2 = bias.reshape(Cout, 1).astype(jnp.float32)

    # Valid-column mask: flat position q is a real pixel iff (q % Wp) < W.
    q = jnp.arange(L, dtype=jnp.int32)
    mask = ((q % Wp) < W).astype(jnp.float32).reshape(1, L)

    cparams = pltpu.CompilerParams(
        dimension_semantics=("parallel",),          # batch tiles shard across TCs (v7x)
        vmem_limit_bytes=32 * 1024 * 1024,
    )

    # ---- pass 1: conv + partial stats ----
    cost1 = pl.CostEstimate(
        flops=2 * N * L * (9 * Cin_p) * Cout,
        transcendentals=0,
        bytes_accessed=(xf.size + w_all.size) * itemsize
        + (mask.size + b2.size + N * Cout * L + N * Cout * 2) * 4,
    )
    y, stats = pl.pallas_call(
        functools.partial(_conv_stats_kernel, Wp=Wp),
        grid_spec=pltpu.PrefetchScalarGridSpec(
            num_scalar_prefetch=0,
            grid=(N,),
            in_specs=[
                pl.BlockSpec((1, Cin_p, Lp), lambda n: (n, 0, 0)),
                pl.BlockSpec((Cout, 9 * Cin_p), lambda n: (0, 0)),
                pl.BlockSpec((Cout, 1), lambda n: (0, 0)),
                pl.BlockSpec((1, L), lambda n: (0, 0)),
            ],
            out_specs=[
                pl.BlockSpec((1, Cout, L), lambda n: (n, 0, 0)),
                pl.BlockSpec((1, Cout, 2), lambda n: (n, 0, 0)),
            ],
            scratch_shapes=[pltpu.VMEM((9 * Cin_p, L), matmul_dtype)],
        ),
        out_shape=(
            jax.ShapeDtypeStruct((N, Cout, L), jnp.float32),
            jax.ShapeDtypeStruct((N, Cout, 2), jnp.float32),
        ),
        compiler_params=cparams,
        cost_estimate=cost1,
    )(xf, w_all, b2, mask)

    # ---- fold global batch stats into per-channel scale/shift (tiny XLA) ----
    count = float(N * H * W)
    s = jnp.sum(stats[:, :, 0], axis=0)                     # (Cout,)
    ss = jnp.sum(stats[:, :, 1], axis=0)
    mean = s / count
    var = ss / count - mean * mean                          # biased var (BN training)
    inv = jax.lax.rsqrt(var + eps)
    g32 = gamma.astype(jnp.float32)
    scale = (g32 * inv).reshape(Cout, 1)
    shift = (beta.astype(jnp.float32) - mean * g32 * inv).reshape(Cout, 1)

    # ---- pass 2: normalize + ReLU ----
    out_itemsize = jnp.dtype(x_nchw.dtype).itemsize
    cost2 = pl.CostEstimate(
        flops=3 * N * Cout * L,
        transcendentals=0,
        bytes_accessed=N * Cout * L * (4 + out_itemsize) + 2 * Cout * 4,
    )
    out_flat = pl.pallas_call(
        _bn_relu_kernel,
        grid_spec=pltpu.PrefetchScalarGridSpec(
            num_scalar_prefetch=0,
            grid=(N,),
            in_specs=[
                pl.BlockSpec((1, Cout, L), lambda n: (n, 0, 0)),
                pl.BlockSpec((Cout, 1), lambda n: (0, 0)),
                pl.BlockSpec((Cout, 1), lambda n: (0, 0)),
            ],
            out_specs=pl.BlockSpec((1, Cout, L), lambda n: (n, 0, 0)),
        ),
        out_shape=jax.ShapeDtypeStruct((N, Cout, L), x_nchw.dtype),
        compiler_params=cparams,
        cost_estimate=cost2,
    )(y, scale, shift)

    # Drop the two pad columns per image row; the result is already NCHW.
    return out_flat.reshape(N, Cout, H, Wp)[:, :, :, :W]


def _reference(x, w, b, gamma, beta, eps=1e-5):
    """Pure-JAX reference matching nn.Conv2d + nn.BatchNorm2d(train) + ReLU."""
    out = jax.lax.conv_general_dilated(
        x, w, window_strides=(1, 1), padding=((1, 1), (1, 1)),
        dimension_numbers=("NCHW", "OIHW", "NCHW"))
    out = out + b[None, :, None, None]
    mean = out.mean(axis=(0, 2, 3), keepdims=True)
    var = ((out - mean) ** 2).mean(axis=(0, 2, 3), keepdims=True)
    out = (out - mean) * jax.lax.rsqrt(var + eps)
    out = out * gamma[None, :, None, None] + beta[None, :, None, None]
    return jnp.maximum(out, 0.0)


if __name__ == "__main__":
    key = jax.random.PRNGKey(0)
    k_x, k_w, k_b = jax.random.split(key, 3)

    N, Cin, Cout, H, W = 2, 4, 8, 16, 16

    x = jax.random.normal(k_x, (N, Cin, H, W), jnp.float32)

    # Deterministic parameter init (Conv2d-style uniform bound 1/sqrt(fan_in)).
    fan_in = Cin * 3 * 3
    bound = 1.0 / (fan_in ** 0.5)
    w = jax.random.uniform(k_w, (Cout, Cin, 3, 3), jnp.float32, -bound, bound)
    b = jax.random.uniform(k_b, (Cout,), jnp.float32, -bound, bound)
    gamma = jnp.ones((Cout,), jnp.float32)   # BatchNorm2d default weight
    beta = jnp.zeros((Cout,), jnp.float32)   # BatchNorm2d default bias

    out = conv_batchnorm_relu(x, w, b, gamma, beta)
    out = jax.block_until_ready(out)

    ref = _reference(x, w, b, gamma, beta)
    assert out.shape == (N, Cout, H, W)
    assert jnp.allclose(out, ref, atol=1e-4, rtol=1e-4), "mismatch vs reference"

    print("KERNEL_OK")
</pallas_src>

<mosaic_0001>
module attributes {stable_mosaic.version = 11 : i64} {
  func.func @_conv_stats_kernel(%arg0: i32, %arg1: memref<1x8x326xf32, #tpu.memory_space<vmem>>, %arg2: memref<8x72xf32, #tpu.memory_space<vmem>>, %arg3: memref<8x1xf32, #tpu.memory_space<vmem>>, %arg4: memref<1x288xf32, #tpu.memory_space<vmem>>, %arg5: memref<1x8x288xf32, #tpu.memory_space<vmem>>, %arg6: memref<1x8x2xf32, #tpu.memory_space<vmem>>, %arg7: memref<72x288xf32, #tpu.memory_space<vmem>>) attributes {dimension_semantics = [#tpu.dimension_semantics<parallel>], iteration_bounds = array<i64: 2>, scalar_prefetch = 0 : i64, scratch_operands = 1 : i64, tpu.core_type = #tpu.core_type<tc>, window_params = [{transform_indices = @transform_0, window_bounds = array<i64: 1, 8, 326>}, {pipeline_mode = #tpu.pipeline_mode<synchronous>, transform_indices = @transform_1, window_bounds = array<i64: 8, 72>}, {pipeline_mode = #tpu.pipeline_mode<synchronous>, transform_indices = @transform_2, window_bounds = array<i64: 8, 1>}, {pipeline_mode = #tpu.pipeline_mode<synchronous>, transform_indices = @transform_3, window_bounds = array<i64: 1, 288>}, {transform_indices = @transform_4, window_bounds = array<i64: 1, 8, 288>}, {transform_indices = @transform_5, window_bounds = array<i64: 1, 8, 2>}]} {
    %c0 = arith.constant 0 : index
    %c0_0 = arith.constant 0 : index
    %c0_1 = arith.constant 0 : index
    %0 = vector.load %arg1[%c0, %c0_0, %c0_1] : memref<1x8x326xf32, #tpu.memory_space<vmem>>, vector<1x8x288xf32>
    %1 = vector.shape_cast %0 : vector<1x8x288xf32> to vector<8x288xf32>
    %c0_2 = arith.constant 0 : index
    %c0_3 = arith.constant 0 : index
    %2 = vector.load %arg7[%c0_2, %c0_3] : memref<72x288xf32, #tpu.memory_space<vmem>>, vector<8x288xf32>
    tpu.vector_store %arg7[%c0_2, %c0_3], %1 {strides = array<i32>} : memref<72x288xf32, #tpu.memory_space<vmem>>, vector<8x288xf32>,
    %c0_4 = arith.constant 0 : index
    %c0_5 = arith.constant 0 : index
    %c1 = arith.constant 1 : index
    %3 = vector.load %arg1[%c0_4, %c0_5, %c1] : memref<1x8x326xf32, #tpu.memory_space<vmem>>, vector<1x8x288xf32>
    %4 = vector.shape_cast %3 : vector<1x8x288xf32> to vector<8x288xf32>
    %c8 = arith.constant 8 : index
    %c0_6 = arith.constant 0 : index
    %5 = vector.load %arg7[%c8, %c0_6] : memref<72x288xf32, #tpu.memory_space<vmem>>, vector<8x288xf32>
    tpu.vector_store %arg7[%c8, %c0_6], %4 {strides = array<i32>} : memref<72x288xf32, #tpu.memory_space<vmem>>, vector<8x288xf32>,
    %c0_7 = arith.constant 0 : index
    %c0_8 = arith.constant 0 : index
    %c2 = arith.constant 2 : index
    %6 = vector.load %arg1[%c0_7, %c0_8, %c2] : memref<1x8x326xf32, #tpu.memory_space<vmem>>, vector<1x8x288xf32>
    %7 = vector.shape_cast %6 : vector<1x8x288xf32> to vector<8x288xf32>
    %c16 = arith.constant 16 : index
    %c0_9 = arith.constant 0 : index
    %8 = vector.load %arg7[%c16, %c0_9] : memref<72x288xf32, #tpu.memory_space<vmem>>, vector<8x288xf32>
    tpu.vector_store %arg7[%c16, %c0_9], %7 {strides = array<i32>} : memref<72x288xf32, #tpu.memory_space<vmem>>, vector<8x288xf32>,
    %c0_10 = arith.constant 0 : index
    %c0_11 = arith.constant 0 : index
    %c18 = arith.constant 18 : index
    %9 = vector.load %arg1[%c0_10, %c0_11, %c18] : memref<1x8x326xf32, #tpu.memory_space<vmem>>, vector<1x8x288xf32>
    %10 = vector.shape_cast %9 : vector<1x8x288xf32> to vector<8x288xf32>
    %c24 = arith.constant 24 : index
    %c0_12 = arith.constant 0 : index
    %11 = vector.load %arg7[%c24, %c0_12] : memref<72x288xf32, #tpu.memory_space<vmem>>, vector<8x288xf32>
    tpu.vector_store %arg7[%c24, %c0_12], %10 {strides = array<i32>} : memref<72x288xf32, #tpu.memory_space<vmem>>, vector<8x288xf32>,
    %c0_13 = arith.constant 0 : index
    %c0_14 = arith.constant 0 : index
    %c19 = arith.constant 19 : index
    %12 = vector.load %arg1[%c0_13, %c0_14, %c19] : memref<1x8x326xf32, #tpu.memory_space<vmem>>, vector<1x8x288xf32>
    %13 = vector.shape_cast %12 : vector<1x8x288xf32> to vector<8x288xf32>
    %c32 = arith.constant 32 : index
    %c0_15 = arith.constant 0 : index
    %14 = vector.load %arg7[%c32, %c0_15] : memref<72x288xf32, #tpu.memory_space<vmem>>, vector<8x288xf32>
    tpu.vector_store %arg7[%c32, %c0_15], %13 {strides = array<i32>} : memref<72x288xf32, #tpu.memory_space<vmem>>, vector<8x288xf32>,
    %c0_16 = arith.constant 0 : index
    %c0_17 = arith.constant 0 : index
    %c20 = arith.constant 20 : index
    %15 = vector.load %arg1[%c0_16, %c0_17, %c20] : memref<1x8x326xf32, #tpu.memory_space<vmem>>, vector<1x8x288xf32>
    %16 = vector.shape_cast %15 : vector<1x8x288xf32> to vector<8x288xf32>
    %c40 = arith.constant 40 : index
    %c0_18 = arith.constant 0 : index
    %17 = vector.load %arg7[%c40, %c0_18] : memref<72x288xf32, #tpu.memory_space<vmem>>, vector<8x288xf32>
    tpu.vector_store %arg7[%c40, %c0_18], %16 {strides = array<i32>} : memref<72x288xf32, #tpu.memory_space<vmem>>, vector<8x288xf32>,
    %c0_19 = arith.constant 0 : index
    %c0_20 = arith.constant 0 : index
    %c36 = arith.constant 36 : index
    %18 = vector.load %arg1[%c0_19, %c0_20, %c36] : memref<1x8x326xf32, #tpu.memory_space<vmem>>, vector<1x8x288xf32>
    %19 = vector.shape_cast %18 : vector<1x8x288xf32> to vector<8x288xf32>
    %c48 = arith.constant 48 : index
    %c0_21 = arith.constant 0 : index
    %20 = vector.load %arg7[%c48, %c0_21] : memref<72x288xf32, #tpu.memory_space<vmem>>, vector<8x288xf32>
    tpu.vector_store %arg7[%c48, %c0_21], %19 {strides = array<i32>} : memref<72x288xf32, #tpu.memory_space<vmem>>, vector<8x288xf32>,
    %c0_22 = arith.constant 0 : index
    %c0_23 = arith.constant 0 : index
    %c37 = arith.constant 37 : index
    %21 = vector.load %arg1[%c0_22, %c0_23, %c37] : memref<1x8x326xf32, #tpu.memory_space<vmem>>, vector<1x8x288xf32>
    %22 = vector.shape_cast %21 : vector<1x8x288xf32> to vector<8x288xf32>
    %c56 = arith.constant 56 : index
    %c0_24 = arith.constant 0 : index
    %23 = vector.load %arg7[%c56, %c0_24] : memref<72x288xf32, #tpu.memory_space<vmem>>, vector<8x288xf32>
    tpu.vector_store %arg7[%c56, %c0_24], %22 {strides = array<i32>} : memref<72x288xf32, #tpu.memory_space<vmem>>, vector<8x288xf32>,
    %c0_25 = arith.constant 0 : index
    %c0_26 = arith.constant 0 : index
    %c38 = arith.constant 38 : index
    %24 = vector.load %arg1[%c0_25, %c0_26, %c38] : memref<1x8x326xf32, #tpu.memory_space<vmem>>, vector<1x8x288xf32>
    %25 = vector.shape_cast %24 : vector<1x8x288xf32> to vector<8x288xf32>
    %c64 = arith.constant 64 : index
    %c0_27 = arith.constant 0 : index
    %26 = vector.load %arg7[%c64, %c0_27] : memref<72x288xf32, #tpu.memory_space<vmem>>, vector<8x288xf32>
    tpu.vector_store %arg7[%c64, %c0_27], %25 {strides = array<i32>} : memref<72x288xf32, #tpu.memory_space<vmem>>, vector<8x288xf32>,
    %c0_28 = arith.constant 0 : index
    %c0_29 = arith.constant 0 : index
    %27 = vector.load %arg2[%c0_28, %c0_29] : memref<8x72xf32, #tpu.memory_space<vmem>>, vector<8x72xf32>
    %c0_30 = arith.constant 0 : index
    %c0_31 = arith.constant 0 : index
    %28 = vector.load %arg7[%c0_30, %c0_31] : memref<72x288xf32, #tpu.memory_space<vmem>>, vector<72x288xf32>
    %cst = arith.constant dense<0.000000e+00> : vector<8x288xf32>
    %29 = tpu.matmul %27, %28, %cst {dimension_numbers = #tpu.dot_dimension_numbers<[1], [0], [0], [1], [0, 0, 1, 1], [], []>} : vector<8x72xf32>, vector<72x288xf32>, vector<8x288xf32> -> vector<8x288xf32>
    %c0_32 = arith.constant 0 : index
    %c0_33 = arith.constant 0 : index
    %30 = vector.load %arg3[%c0_32, %c0_33] : memref<8x1xf32, #tpu.memory_space<vmem>>, vector<8x1xf32>
    %31 = vector.broadcast %30 : vector<8x1xf32> to vector<8x288xf32>
    %32 = arith.addf %29, %31 : vector<8x288xf32>
    %c0_34 = arith.constant 0 : index
    %c0_35 = arith.constant 0 : index
    %c0_36 = arith.constant 0 : index
    %33 = vector.load %arg5[%c0_34, %c0_35, %c0_36] : memref<1x8x288xf32, #tpu.memory_space<vmem>>, vector<1x8x288xf32>
    %34 = vector.shape_cast %33 : vector<1x8x288xf32> to vector<8x288xf32>
    %35 = vector.shape_cast %32 : vector<8x288xf32> to vector<1x8x288xf32>
    tpu.vector_store %arg5[%c0_34, %c0_35, %c0_36], %35 {strides = array<i32>} : memref<1x8x288xf32, #tpu.memory_space<vmem>>, vector<1x8x288xf32>,
    %c0_37 = arith.constant 0 : index
    %c0_38 = arith.constant 0 : index
    %36 = vector.load %arg4[%c0_37, %c0_38] : memref<1x288xf32, #tpu.memory_space<vmem>>, vector<1x288xf32>
    %37 = vector.broadcast %36 : vector<1x288xf32> to vector<8x288xf32>
    %38 = arith.mulf %32, %37 : vector<8x288xf32>
    %cst_39 = arith.constant dense<0.000000e+00> : vector<8xf32>
    %39 = vector.multi_reduction <add>, %38, %cst_39 [1] : vector<8x288xf32> to vector<8xf32>
    %40 = vector.shape_cast %39 : vector<8xf32> to vector<8x1xf32>
    %c0_40 = arith.constant 0 : index
    %c0_41 = arith.constant 0 : index
    %c0_42 = arith.constant 0 : index
    %41 = vector.load %arg6[%c0_40, %c0_41, %c0_42] : memref<1x8x2xf32, #tpu.memory_space<vmem>>, vector<1x8x1xf32>
    %42 = vector.shape_cast %41 : vector<1x8x1xf32> to vector<8x1xf32>
    %43 = vector.shape_cast %40 : vector<8x1xf32> to vector<1x8x1xf32>
    tpu.vector_store %arg6[%c0_40, %c0_41, %c0_42], %43 {strides = array<i32>} : memref<1x8x2xf32, #tpu.memory_space<vmem>>, vector<1x8x1xf32>,
    %44 = arith.mulf %38, %38 : vector<8x288xf32>
    %cst_43 = arith.constant dense<0.000000e+00> : vector<8xf32>
    %45 = vector.multi_reduction <add>, %44, %cst_43 [1] : vector<8x288xf32> to vector<8xf32>
    %46 = vector.shape_cast %45 : vector<8xf32> to vector<8x1xf32>
    %c0_44 = arith.constant 0 : index
    %c0_45 = arith.constant 0 : index
    %c1_46 = arith.constant 1 : index
    %47 = vector.load %arg6[%c0_44, %c0_45, %c1_46] : memref<1x8x2xf32, #tpu.memory_space<vmem>>, vector<1x8x1xf32>
    %48 = vector.shape_cast %47 : vector<1x8x1xf32> to vector<8x1xf32>
    %49 = vector.shape_cast %46 : vector<8x1xf32> to vector<1x8x1xf32>
    tpu.vector_store %arg6[%c0_44, %c0_45, %c1_46], %49 {strides = array<i32>} : memref<1x8x2xf32, #tpu.memory_space<vmem>>, vector<1x8x1xf32>,
    return
  }
  func.func @transform_0(%arg0: i32) -> (i32, i32, i32) {
    %c0_i32 = arith.constant 0 : i32
    %c0_i32_0 = arith.constant 0 : i32
    %c0_i32_1 = arith.constant 0 : i32
    return %arg0, %c0_i32, %c0_i32_0 : i32, i32, i32
  }
  func.func @transform_1(%arg0: i32) -> (i32, i32) {
    %c0_i32 = arith.constant 0 : i32
    %c0_i32_0 = arith.constant 0 : i32
    %c0_i32_1 = arith.constant 0 : i32
    return %c0_i32, %c0_i32_0 : i32, i32
  }
  func.func @transform_2(%arg0: i32) -> (i32, i32) {
    %c0_i32 = arith.constant 0 : i32
    %c0_i32_0 = arith.constant 0 : i32
    %c0_i32_1 = arith.constant 0 : i32
    return %c0_i32, %c0_i32_0 : i32, i32
  }
  func.func @transform_3(%arg0: i32) -> (i32, i32) {
    %c0_i32 = arith.constant 0 : i32
    %c0_i32_0 = arith.constant 0 : i32
    %c0_i32_1 = arith.constant 0 : i32
    return %c0_i32, %c0_i32_0 : i32, i32
  }
  func.func @transform_4(%arg0: i32) -> (i32, i32, i32) {
    %c0_i32 = arith.constant 0 : i32
    %c0_i32_0 = arith.constant 0 : i32
    %c0_i32_1 = arith.constant 0 : i32
    return %arg0, %c0_i32, %c0_i32_0 : i32, i32, i32
  }
  func.func @transform_5(%arg0: i32) -> (i32, i32, i32) {
    %c0_i32 = arith.constant 0 : i32
    %c0_i32_0 = arith.constant 0 : i32
    %c0_i32_1 = arith.constant 0 : i32
    return %arg0, %c0_i32, %c0_i32_0 : i32, i32, i32
  }
}

</mosaic_0001>

<llo_original>
// kernel: tpu_custom_call.1
$region0: #{tpu_custom_call.1}
  #allocation0 [shape = 'u32[]', space=smem, size = 0x4, offset = 0x4, fixed_abs, tag = 'smem constant byte address 0x4 - core index']
  #allocation1 [shape = 'u32[144,128]{1,0:T(1,128)}', space=vmem, size = 0x12000, scoped, tag = 'internal scratch']
  #allocation2 [shape = 'f32[72,288]{1,0:T(8,128)}', space=vmem, size = 0x1b000, scoped, tag = 'scratch operand']
  %s0 = inlined_call_operand.hbm [shape: f32[2,8,326], index: 0, kind: input, shape index: {}]
  %s1 = inlined_call_operand.vmem [shape: f32[8,72], index: 1, kind: input, shape index: {}]
  %s2 = inlined_call_operand.vmem [shape: f32[8,1], index: 2, kind: input, shape index: {}]
  %s3 = inlined_call_operand.vmem [shape: f32[1,288], index: 3, kind: input, shape index: {}]
  %s4 = inlined_call_operand.hbm [shape: f32[2,8,288], index: 4, kind: output, shape index: {0}]
  %s5 = inlined_call_operand.vmem [shape: f32[2,8,2], index: 5, kind: output, shape index: {1}]
  %6 = xla_tuple %s4, %s5
  %s7 = sld [smem:[#allocation0]]
  $region61: #{tpu_custom_call.1} parent=0
    _
  %s9 = ssub.s32 1, %s7
  %s10 = scalar_select 0, %s9, %s7
  $region1: #{tpu_custom_call.1} parent=0
    #allocation3 [shape = 'u8[24576]{0}', space=vmem, size = 0x6000, scoped, tag = 'input window, operand 0']
    #allocation4 [shape = 's32[2]{0}', space=sflag, size = 0x8, scoped, tag = 'scoped memory for tpu_custom_call.1']
    #allocation5 [shape = 's32[2]{0}', space=sflag, size = 0x8, scoped, tag = 'scoped memory for tpu_custom_call.1']
    #allocation6 [shape = 'u8[24576]{0}', space=vmem, size = 0x6000, scoped, tag = 'output window, operand 0']
    %11 = vsyncpa [#allocation4], 0
    %s12 = scalar_lea.sflag [#allocation4], 1
    %13 = vsyncpa %s12, 0
    %14 = vsyncpa [#allocation5], 0
    %s15 = scalar_lea.sflag [#allocation5], 1
    %16 = vsyncpa %s15, 0
    loop: start=0, step=1, limit=4
    $region2: #{tpu_custom_call.1} parent=1 // loop_pre_header
      _
    $region3: #{tpu_custom_call.1} parent=1 // loop_header
      %s18 = sphi 0, %s22
      %p19 = scmp.ge.s32.totalorder %s18, 4
      %s28 = sphi 0, %s30
      %s31 = sphi 0, %s28
      %s32 = sphi 0, %s31
      %s48 = sphi 0, %s32
      %s52 = sphi 0, %s52
      %s54 = sphi 0, %s52
      %s55 = sphi 0, %s54
      %s69 = sphi 0, %s55
      %s73 = sphi 0, %s73
      %s75 = sphi 0, %s73
      %s76 = sphi 0, %s75
      %s90 = sphi 0, %s76
      %s94 = sphi 0, %s94
      %s96 = sphi 0, %s94
      %s97 = sphi 0, %s96
      %s111 = sphi 0, %s97
      %s117 = sphi 0, %s119
      %s120 = sphi 0, %s117
      %s121 = sphi 0, %s120
      %s137 = sphi 0, %s121
      %s143 = sphi 0, %s145
      %s146 = sphi 0, %s143
      %s147 = sphi 0, %s146
      %s163 = sphi 0, %s147
    $region4: #{tpu_custom_call.1} parent=1 // loop_header_branch
      %21 = sbr.rel (%p19) target = $region8
    $region5: #{tpu_custom_call.1} parent=1 // loop_body
      %s23 = ssub.s32 %s18, 1
      %s24 = ssub.s32 %s18, 2
      %s25 = sadd.s32 %s18, 1
      %s26 = ssub.s32 %s18, %s25
      %p27 = scmp.eq.s32.totalorder %s26, 0
      %s29 = sadd.s32 %s28, 1
      %s30 = scalar_select %p27, %s28, %s29
      %p33 = pneg %p27
      %p34 = scmp.eq.s32.totalorder %s18, 1
      %p35 = por %p33, %p34
      %p36 = scmp.ne.s32.totalorder %s28, %s31
      %p37 = scmp.eq.s32.totalorder %s18, 0
      %p38 = por %p36, %p37
      %p39 = scmp.ne.s32.totalorder %s28, %s31
      %p40 = scmp.eq.s32.totalorder %s23, 1
      %p41 = por %p39, %p40
      %p42 = scmp.ne.s32.totalorder %s31, %s32
      %p43 = scmp.eq.s32.totalorder %s23, 0
      %p44 = por %p42, %p43
      %p45 = scmp.ne.s32.totalorder %s31, %s32
      %p46 = scmp.eq.s32.totalorder %s24, 1
      %p47 = por %p45, %p46
      %p49 = scmp.ne.s32.totalorder %s32, %s48
      %p50 = scmp.eq.s32.totalorder %s24, 0
      %p51 = por %p49, %p50
      %s53 = sadd.s32 %s52, 1
      %p56 = scmp.eq.s32.totalorder %s18, 1
      %p57 = scmp.ne.s32.totalorder %s52, %s54
      %p58 = scmp.eq.s32.totalorder %s18, 0
      %p59 = por %p57, %p58
      %p60 = scmp.ne.s32.totalorder %s52, %s54
      %p61 = scmp.eq.s32.totalorder %s23, 1
      %p62 = por %p60, %p61
      %p63 = scmp.ne.s32.totalorder %s54, %s55
      %p64 = scmp.eq.s32.totalorder %s23, 0
      %p65 = por %p63, %p64
      %p66 = scmp.ne.s32.totalorder %s54, %s55
      %p67 = scmp.eq.s32.totalorder %s24, 1
      %p68 = por %p66, %p67
      %p70 = scmp.ne.s32.totalorder %s55, %s69
      %p71 = scmp.eq.s32.totalorder %s24, 0
      %p72 = por %p70, %p71
      %s74 = sadd.s32 %s73, 1
      %p77 = scmp.eq.s32.totalorder %s18, 1
      %p78 = scmp.ne.s32.totalorder %s73, %s75
      %p79 = scmp.eq.s32.totalorder %s18, 0
      %p80 = por %p78, %p79
      %p81 = scmp.ne.s32.totalorder %s73, %s75
      %p82 = scmp.eq.s32.totalorder %s23, 1
      %p83 = por %p81, %p82
      %p84 = scmp.ne.s32.totalorder %s75, %s76
      %p85 = scmp.eq.s32.totalorder %s23, 0
      %p86 = por %p84, %p85
      %p87 = scmp.ne.s32.totalorder %s75, %s76
      %p88 = scmp.eq.s32.totalorder %s24, 1
      %p89 = por %p87, %p88
      %p91 = scmp.ne.s32.totalorder %s76, %s90
      %p92 = scmp.eq.s32.totalorder %s24, 0
      %p93 = por %p91, %p92
      %s95 = sadd.s32 %s94, 1
      %p98 = scmp.eq.s32.totalorder %s18, 1
      %p99 = scmp.ne.s32.totalorder %s94, %s96
      %p100 = scmp.eq.s32.totalorder %s18, 0
      %p101 = por %p99, %p100
      %p102 = scmp.ne.s32.totalorder %s94, %s96
      %p103 = scmp.eq.s32.totalorder %s23, 1
      %p104 = por %p102, %p103
      %p105 = scmp.ne.s32.totalorder %s96, %s97
      %p106 = scmp.eq.s32.totalorder %s23, 0
      %p107 = por %p105, %p106
      %p108 = scmp.ne.s32.totalorder %s96, %s97
      %p109 = scmp.eq.s32.totalorder %s24, 1
      %p110 = por %p108, %p109
      %p112 = scmp.ne.s32.totalorder %s97, %s111
      %p113 = scmp.eq.s32.totalorder %s24, 0
      %p114 = por %p112, %p113
      %s115 = ssub.s32 %s18, %s25
      %p116 = scmp.eq.s32.totalorder %s115, 0
      %s118 = sadd.s32 %s117, 1
      %s119 = scalar_select %p116, %s117, %s118
      %p122 = pneg %p116
      %p123 = scmp.eq.s32.totalorder %s18, 1
      %p124 = por %p122, %p123
      %p125 = scmp.ne.s32.totalorder %s117, %s120
      %p126 = scmp.eq.s32.totalorder %s18, 0
      %p127 = por %p125, %p126
      %p128 = scmp.ne.s32.totalorder %s117, %s120
      %p129 = scmp.eq.s32.totalorder %s23, 1
      %p130 = por %p128, %p129
      %p131 = scmp.ne.s32.totalorder %s120, %s121
      %p132 = scmp.eq.s32.totalorder %s23, 0
      %p133 = por %p131, %p132
      %p134 = scmp.ne.s32.totalorder %s120, %s121
      %p135 = scmp.eq.s32.totalorder %s24, 1
      %p136 = por %p134, %p135
      %p138 = scmp.ne.s32.totalorder %s121, %s137
      %p139 = scmp.eq.s32.totalorder %s24, 0
      %p140 = por %p138, %p139
      %s141 = ssub.s32 %s18, %s25
      %p142 = scmp.eq.s32.totalorder %s141, 0
      %s144 = sadd.s32 %s143, 1
      %s145 = scalar_select %p142, %s143, %s144
      %p148 = pneg %p142
      %p149 = scmp.eq.s32.totalorder %s18, 1
      %p150 = por %p148, %p149
      %p151 = scmp.ne.s32.totalorder %s143, %s146
      %p152 = scmp.eq.s32.totalorder %s18, 0
      %p153 = por %p151, %p152
      %p154 = scmp.ne.s32.totalorder %s143, %s146
      %p155 = scmp.eq.s32.totalorder %s23, 1
      %p156 = por %p154, %p155
      %p157 = scmp.ne.s32.totalorder %s146, %s147
      %p158 = scmp.eq.s32.totalorder %s23, 0
      %p159 = por %p157, %p158
      %p160 = scmp.ne.s32.totalorder %s146, %s147
      %p161 = scmp.eq.s32.totalorder %s24, 1
      %p162 = por %p160, %p161
      %p164 = scmp.ne.s32.totalorder %s147, %s163
      %p165 = scmp.eq.s32.totalorder %s24, 0
      %p166 = por %p164, %p165
      %p167 = scmp.le.s32.totalorder 1, %s18
      %p168 = scmp.lt.s32.totalorder %s18, 3
      %p169 = pnand %p167, %p168
      %p170 = pneg %p169
      // Predicated region
      $region9: #{tpu_custom_call.1} parent=5 // pred_check
        _
      $region10: #{tpu_custom_call.1} parent=5 // pred_check_branch
        %172 = sbr.rel (%p169) target = $region12
      $region11: #{tpu_custom_call.1} parent=5 // pred_region
        %s173 = ssub.s32 %s18, 1
        // Predicated region
        $region13: #{tpu_custom_call.1} parent=11 // pred_check
          %p174 = pneg %p65
        $region14: #{tpu_custom_call.1} parent=11 // pred_check_branch
          %176 = sbr.rel (%p174) target = $region16
        $region15: #{tpu_custom_call.1} parent=11 // pred_region
          _
        $region16: #{tpu_custom_call.1} parent=11 // pred_fallthru
          _
        // Predicated region
        $region17: #{tpu_custom_call.1} parent=11 // pred_check
          %p177 = pneg %p86
        $region18: #{tpu_custom_call.1} parent=11 // pred_check_branch
          %179 = sbr.rel (%p177) target = $region20
        $region19: #{tpu_custom_call.1} parent=11 // pred_region
          _
        $region20: #{tpu_custom_call.1} parent=11 // pred_fallthru
          _
        // Predicated region
        $region21: #{tpu_custom_call.1} parent=11 // pred_check
          %p180 = pneg %p107
        $region22: #{tpu_custom_call.1} parent=11 // pred_check_branch
          %182 = sbr.rel (%p180) target = $region24
        $region23: #{tpu_custom_call.1} parent=11 // pred_region
          _
        $region24: #{tpu_custom_call.1} parent=11 // pred_fallthru
          _
      $region12: #{tpu_custom_call.1} parent=5 // pred_fallthru
        _
      %p183 = scmp.lt.s32.totalorder %s18, 2
      // Predicated region
      $region25: #{tpu_custom_call.1} parent=5 // pred_check
        %p184 = pneg %p183
      $region26: #{tpu_custom_call.1} parent=5 // pred_check_branch
        %186 = sbr.rel (%p184) target = $region28
      $region27: #{tpu_custom_call.1} parent=5 // pred_region
        // Predicated region
        $region29: #{tpu_custom_call.1} parent=27 // pred_check
          %p187 = pneg %p38
        $region30: #{tpu_custom_call.1} parent=27 // pred_check_branch
          %189 = sbr.rel (%p187) target = $region32
        $region31: #{tpu_custom_call.1} parent=27 // pred_region
          %s190 = sand.u32 %s28, 1
          %s191 = scalar_lea.sflag [#allocation4], %s190
          %s192 = sand.u32 %s28, 1
          %s193 = smul.addr %s192, 24
          %s194 = scalar_lea.vmem [#allocation3], %s193
          %s196 = ssub.s32 384, 384
          %197 = vsyncadd %s191, %s196
          %s198 = smul.addr %s18, 3
          %s199 = smul.addr %s198, 128
          %s200 = scalar_lea.hbm %s0, %s199
          %s202 = sshll.u32 %s194, 4
          %s203 = int_to_ptr.vmem [resolvable:$true] %s202
          %205 = dma.hbm_to_vmem [thread:$0]  %s200, 384, %s203, %s191
        $region32: #{tpu_custom_call.1} parent=27 // pred_fallthru
          _
      $region28: #{tpu_custom_call.1} parent=5 // pred_fallthru
        _
      %p206 = scmp.le.s32.totalorder 1, %s18
      %p207 = scmp.lt.s32.totalorder %s18, 3
      %p208 = pnand %p206, %p207
      %p209 = pneg %p208
      // Predicated region
      $region33: #{tpu_custom_call.1} parent=5 // pred_check
        _
      $region34: #{tpu_custom_call.1} parent=5 // pred_check_branch
        %211 = sbr.rel (%p208) target = $region36
      $region35: #{tpu_custom_call.1} parent=5 // pred_region
        %s212 = ssub.s32 %s18, 1
        %s213 = sand.u32 %s31, 1
        %s214 = scalar_lea.sflag [#allocation4], %s213
        %s215 = sand.u32 %s31, 1
        %s216 = smul.addr %s215, 24
        %s217 = scalar_lea.vmem [#allocation3], %s216
        // Predicated region
        $region37: #{tpu_custom_call.1} parent=35 // pred_check
          %p218 = pneg %p44
        $region38: #{tpu_custom_call.1} parent=35 // pred_check_branch
          %220 = sbr.rel (%p218) target = $region40
        $region39: #{tpu_custom_call.1} parent=35 // pred_region
          %221 = dma.done %s214, 384
        $region40: #{tpu_custom_call.1} parent=35 // pred_fallthru
          _
        %s222 = sand.u32 %s31, 1
        %s223 = scalar_lea.sflag [#allocation4], %s222
        %s224 = sand.u32 %s31, 1
        %s225 = smul.addr %s224, 24
        %s226 = scalar_lea.vmem [#allocation3], %s225
        %p227 = pneg %p44
        %p228 = pneg %p41
        %p229 = pneg %p65
        %p230 = pneg %p62
        %p231 = pneg %p86
        %p232 = pneg %p83
        %p233 = pneg %p107
        %p234 = pneg %p104
        %p235 = pneg %p133
        %p236 = pneg %p130
        %s237 = sand.u32 %s120, 1
        %s238 = scalar_lea.sflag [#allocation5], %s237
        %s239 = sand.u32 %s120, 1
        %s240 = smul.addr %s239, 24
        %s241 = scalar_lea.vmem [#allocation6], %s240
        %p242 = pneg %p159
        %p243 = pneg %p156
        %p244 = scmp.lt.s32.totalorder %s23, 1
        %s245 = scalar_select %p244, %s23, 1
        %s246 = smul.addr %s245, 8
        %s247 = scalar_lea.vmem %s5, %s246
        %p248 = scmp.lt.s32.totalorder %s23, 1
        %s249 = scalar_select %p248, %s23, 1
        %s250 = smul.addr %s249, 8
        %s251 = scalar_lea.vmem %s5, %s250
        %v252 = vld [vmem:[%s217] sm:$0xff]
        %v253 = vld [vmem:[%s217 + $0x8] sm:$0xff]
        %v254 = vld [vmem:[%s217 + $0x10] sm:$0xff]
        %255 = vst [vmem:[#allocation2] sm:$0xff] %v252
        %256 = vst [vmem:[#allocation2 + $0x8] sm:$0xff] %v253
        %vm257 = vcmask 261120
        %258 = vst.msk [vmem:[#allocation2 + $0x10] sm:$0xff] %vm257, %v254
        %v259 = vld [vmem:[%s217] sm:$0xff]
        %v260 = vld [vmem:[%s217 + $0x8] sm:$0xff]
        %v261 = vld [vmem:[%s217 + $0x10] sm:$0xff]
        %265 = vrot.lane.b32.xlu0 %v259, 127
        %v266 = vpop.permute.xlu0 %265
        %267 = vrot.lane.b32.xlu0 %v260, 127
        %v268 = vpop.permute.xlu0 %267
        %269 = vrot.lane.b32.xlu0 %v261, 127
        %v270 = vpop.permute.xlu0 %269
        %vm271 = vcmask 1039360
        %v272 = vsel %vm271, %v266, %v268
        %v273 = vsel %vm271, %v268, %v270
        %277 = vst [vmem:[#allocation2 + $0x18] sm:$0xff] %v272
        %278 = vst [vmem:[#allocation2 + $0x20] sm:$0xff] %v273
        %279 = vst.msk [vmem:[#allocation2 + $0x28] sm:$0xff] %vm257, %v270
        %v280 = vld [vmem:[%s217] sm:$0xff]
        %v281 = vld [vmem:[%s217 + $0x8] sm:$0xff]
        %v282 = vld [vmem:[%s217 + $0x10] sm:$0xff]
        %286 = vrot.lane.b32.xlu0 %v280, 126
        %v287 = vpop.permute.xlu0 %286
        %288 = vrot.lane.b32.xlu0 %v281, 126
        %v289 = vpop.permute.xlu0 %288
        %290 = vrot.lane.b32.xlu0 %v282, 126
        %v291 = vpop.permute.xlu0 %290
        %vm292 = vcmask 1031168
        %v293 = vsel %vm292, %v287, %v289
        %v294 = vsel %vm292, %v289, %v291
        %298 = vst [vmem:[#allocation2 + $0x30] sm:$0xff] %v293
        %299 = vst [vmem:[#allocation2 + $0x38] sm:$0xff] %v294
        %300 = vst.msk [vmem:[#allocation2 + $0x40] sm:$0xff] %vm257, %v291
        %v301 = vld [vmem:[%s217] sm:$0xff]
        %v302 = vld [vmem:[%s217 + $0x8] sm:$0xff]
        %v303 = vld [vmem:[%s217 + $0x10] sm:$0xff]
        %307 = vrot.lane.b32.xlu0 %v301, 110
        %v308 = vpop.permute.xlu0 %307
        %309 = vrot.lane.b32.xlu0 %v302, 110
        %v310 = vpop.permute.xlu0 %309
        %311 = vrot.lane.b32.xlu0 %v303, 110
        %v312 = vpop.permute.xlu0 %311
        %vm313 = vcmask 900096
        %v314 = vsel %vm313, %v308, %v310
        %v315 = vsel %vm313, %v310, %v312
        %319 = vst [vmem:[#allocation2 + $0x48] sm:$0xff] %v314
        %320 = vst [vmem:[#allocation2 + $0x50] sm:$0xff] %v315
        %321 = vst.msk [vmem:[#allocation2 + $0x58] sm:$0xff] %vm257, %v312
        %v322 = vld [vmem:[%s217] sm:$0xff]
        %v323 = vld [vmem:[%s217 + $0x8] sm:$0xff]
        %v324 = vld [vmem:[%s217 + $0x10] sm:$0xff]
        %328 = vrot.lane.b32.xlu0 %v322, 109
        %v329 = vpop.permute.xlu0 %328
        %330 = vrot.lane.b32.xlu0 %v323, 109
        %v331 = vpop.permute.xlu0 %330
        %332 = vrot.lane.b32.xlu0 %v324, 109
        %v333 = vpop.permute.xlu0 %332
        %vm334 = vcmask 891904
        %v335 = vsel %vm334, %v329, %v331
        %v336 = vsel %vm334, %v331, %v333
        %340 = vst [vmem:[#allocation2 + $0x60] sm:$0xff] %v335
        %341 = vst [vmem:[#allocation2 + $0x68] sm:$0xff] %v336
        %342 = vst.msk [vmem:[#allocation2 + $0x70] sm:$0xff] %vm257, %v333
        %v343 = vld [vmem:[%s217] sm:$0xff]
        %v344 = vld [vmem:[%s217 + $0x8] sm:$0xff]
        %v345 = vld [vmem:[%s217 + $0x10] sm:$0xff]
        %349 = vrot.lane.b32.xlu0 %v343, 108
        %v350 = vpop.permute.xlu0 %349
        %351 = vrot.lane.b32.xlu0 %v344, 108
        %v352 = vpop.permute.xlu0 %351
        %353 = vrot.lane.b32.xlu0 %v345, 108
        %v354 = vpop.permute.xlu0 %353
        %vm355 = vcmask 883712
        %v356 = vsel %vm355, %v350, %v352
        %v357 = vsel %vm355, %v352, %v354
        %361 = vst [vmem:[#allocation2 + $0x78] sm:$0xff] %v356
        %362 = vst [vmem:[#allocation2 + $0x80] sm:$0xff] %v357
        %363 = vst.msk [vmem:[#allocation2 + $0x88] sm:$0xff] %vm257, %v354
        %v364 = vld [vmem:[%s217] sm:$0xff]
        %v365 = vld [vmem:[%s217 + $0x8] sm:$0xff]
        %v366 = vld [vmem:[%s217 + $0x10] sm:$0xff]
        %370 = vrot.lane.b32.xlu0 %v364, 92
        %v371 = vpop.permute.xlu0 %370
        %372 = vrot.lane.b32.xlu0 %v365, 92
        %v373 = vpop.permute.xlu0 %372
        %374 = vrot.lane.b32.xlu0 %v366, 92
        %v375 = vpop.permute.xlu0 %374
        %vm376 = vcmask 752640
        %v377 = vsel %vm376, %v371, %v373
        %v378 = vsel %vm376, %v373, %v375
        %382 = vst [vmem:[#allocation2 + $0x90] sm:$0xff] %v377
        %383 = vst [vmem:[#allocation2 + $0x98] sm:$0xff] %v378
        %384 = vst.msk [vmem:[#allocation2 + $0xa0] sm:$0xff] %vm257, %v375
        %v385 = vld [vmem:[%s217] sm:$0xff]
        %v386 = vld [vmem:[%s217 + $0x8] sm:$0xff]
        %v387 = vld [vmem:[%s217 + $0x10] sm:$0xff]
        %391 = vrot.lane.b32.xlu0 %v385, 91
        %v392 = vpop.permute.xlu0 %391
        %393 = vrot.lane.b32.xlu0 %v386, 91
        %v394 = vpop.permute.xlu0 %393
        %395 = vrot.lane.b32.xlu0 %v387, 91
        %v396 = vpop.permute.xlu0 %395
        %vm397 = vcmask 744448
        %v398 = vsel %vm397, %v392, %v394
        %v399 = vsel %vm397, %v394, %v396
        %403 = vst [vmem:[#allocation2 + $0xa8] sm:$0xff] %v398
        %404 = vst [vmem:[#allocation2 + $0xb0] sm:$0xff] %v399
        %405 = vst.msk [vmem:[#allocation2 + $0xb8] sm:$0xff] %vm257, %v396
        %v406 = vld [vmem:[%s217] sm:$0xff]
        %v407 = vld [vmem:[%s217 + $0x8] sm:$0xff]
        %v408 = vld [vmem:[%s217 + $0x10] sm:$0xff]
        %412 = vrot.lane.b32.xlu0 %v406, 90
        %v413 = vpop.permute.xlu0 %412
        %414 = vrot.lane.b32.xlu0 %v407, 90
        %v415 = vpop.permute.xlu0 %414
        %416 = vrot.lane.b32.xlu0 %v408, 90
        %v417 = vpop.permute.xlu0 %416
        %vm418 = vcmask 736256
        %v419 = vsel %vm418, %v413, %v415
        %v420 = vsel %vm418, %v415, %v417
        %424 = vst [vmem:[#allocation2 + $0xc0] sm:$0xff] %v419
        %425 = vst [vmem:[#allocation2 + $0xc8] sm:$0xff] %v420
        %426 = vst.msk [vmem:[#allocation2 + $0xd0] sm:$0xff] %vm257, %v417
        %v427 = vld [vmem:[%s1] sm:$0xff]
        %v428 = vld [vmem:[#allocation2] sm:$0xff]
        %v429 = vld [vmem:[#allocation2 + $0x8] sm:$0xff]
        %v430 = vld [vmem:[#allocation2 + $0x10] sm:$0xff]
        %v431 = vld [vmem:[#allocation2 + $0x18] sm:$0xff]
        %v432 = vld [vmem:[#allocation2 + $0x20] sm:$0xff]
        %v433 = vld [vmem:[#allocation2 + $0x28] sm:$0xff]
        %v434 = vld [vmem:[#allocation2 + $0x30] sm:$0xff]
        %v435 = vld [vmem:[#allocation2 + $0x38] sm:$0xff]
        %v436 = vld [vmem:[#allocation2 + $0x40] sm:$0xff]
        %v437 = vld [vmem:[#allocation2 + $0x48] sm:$0xff]
        %v438 = vld [vmem:[#allocation2 + $0x50] sm:$0xff]
        %v439 = vld [vmem:[#allocation2 + $0x58] sm:$0xff]
        %v440 = vld [vmem:[#allocation2 + $0x60] sm:$0xff]
        %v441 = vld [vmem:[#allocation2 + $0x68] sm:$0xff]
        %v442 = vld [vmem:[#allocation2 + $0x70] sm:$0xff]
        %v443 = vld [vmem:[#allocation2 + $0x78] sm:$0xff]
        %v444 = vld [vmem:[#allocation2 + $0x80] sm:$0xff]
        %v445 = vld [vmem:[#allocation2 + $0x88] sm:$0xff]
        %v446 = vld [vmem:[#allocation2 + $0x90] sm:$0xff]
        %v447 = vld [vmem:[#allocation2 + $0x98] sm:$0xff]
        %v448 = vld [vmem:[#allocation2 + $0xa0] sm:$0xff]
        %v449 = vld [vmem:[#allocation2 + $0xa8] sm:$0xff]
        %v450 = vld [vmem:[#allocation2 + $0xb0] sm:$0xff]
        %v451 = vld [vmem:[#allocation2 + $0xb8] sm:$0xff]
        %v452 = vld [vmem:[#allocation2 + $0xc0] sm:$0xff]
        %v453 = vld [vmem:[#allocation2 + $0xc8] sm:$0xff]
        %v454 = vld [vmem:[#allocation2 + $0xd0] sm:$0xff]
        %v455 = vld [vmem:[%s2] sm:$0xff]
        %457 = vset.pattern.permute.xlu0 0
        %458 = vperm.xlu0 %457, %v455
        %v459 = vpop.permute.xlu0 %458
        %vm461 = vcmask 588800
        %v463 = vsel %vm461, %v427, 0
        %465 = vmatprep.subr.mxu0 %v429
        %466 = vmatpush1.msra.mxu0 %v428
        %467 = vmatprep.subr.mxu0 %v432
        %468 = vmatpush1.msra.mxu0 %v431
        %469 = vmatprep.subr.mxu0 %v435
        %470 = vmatpush1.msra.mxu0 %v434
        %471 = vmatprep.subr.mxu0 %v438
        %472 = vmatpush1.msra.mxu0 %v437
        %473 = vmatprep.subr.mxu0 %v441
        %474 = vmatpush1.msra.mxu0 %v440
        %475 = vmatprep.subr.mxu0 %v444
        %476 = vmatpush1.msra.mxu0 %v443
        %477 = vmatprep.subr.mxu0 %v447
        %478 = vmatpush1.msra.mxu0 %v446
        %479 = vmatprep.subr.mxu0 %v450
        %480 = vmatpush1.msra.mxu0 %v449
        %481 = vmatprep.subr.mxu0 %v453
        %482 = vmatpush1.msra.mxu0 %v452
        %483 = vmatprep.subr.mxu0 0.0
        %484 = vmatpush1.msra.mxu0 0.0
        %485 = vmatprep.subr.mxu0 0.0
        %486 = vmatpush1.msra.mxu0 0.0
        %487 = vmatprep.subr.mxu0 0.0
        %488 = vmatpush1.msra.mxu0 0.0
        %489 = vmatprep.subr.mxu0 0.0
        %490 = vmatpush1.msra.mxu0 0.0
        %491 = vmatprep.subr.mxu0 0.0
        %492 = vmatpush1.msra.mxu0 0.0
        %493 = vmatprep.subr.mxu0 0.0
        %494 = vmatpush1.msra.mxu0 0.0
        %495 = vmatprep.subr.mxu0 0.0
        %496 = vmatpush1.msra.mxu0 0.0
        %497 = vmatprep.subr.mxu0 0.0
        %498 = vmatpush1.msra.mxu0 0.0
        %499 = vmatprep.subr.mxu0 0.0
        %500 = vmatpush1.msra.mxu0 0.0
        %501 = vmatprep.subr.mxu0 0.0
        %502 = vmatpush1.msra.mxu0 0.0
        %503 = vmatprep.subr.mxu0 0.0
        %504 = vmatpush1.msra.mxu0 0.0
        %505 = vmatprep.subr.mxu0 0.0
        %506 = vmatpush1.msra.mxu0 0.0
        %507 = vmatprep.subr.mxu0 0.0
        %508 = vmatpush1.msra.mxu0 0.0
        %509 = vmatprep.subr.mxu0 0.0
        %510 = vmatpush1.msra.mxu0 0.0
        %511 = vmatprep.subr.mxu0 0.0
        %512 = vmatpush1.msra.mxu0 0.0
        %513 = vmatprep.subr.mxu0 0.0
        %514 = vmatpush1.msra.mxu0 0.0
        %515 = vmatprep.subr.mxu0 0.0
        %516 = vmatpush1.msra.mxu0 0.0
        %517 = vmatprep.subr.mxu0 0.0
        %518 = vmatpush1.msra.mxu0 0.0
        %519 = vmatprep.subr.mxu0 0.0
        %520 = vmatpush1.msra.mxu0 0.0
        %521 = vmatprep.subr.mxu0 0.0
        %522 = vmatpush1.msra.mxu0 0.0
        %523 = vmatprep.subr.mxu0 0.0
        %524 = vmatpush1.msra.mxu0 0.0
        %525 = vmatprep.subr.mxu0 0.0
        %526 = vmatpush1.msra.mxu0 0.0
        %527 = vmatprep.subr.mxu0 0.0
        %528 = vmatpush1.msra.mxu0 0.0
        %529 = vmatprep.mubr.f32.mxu0 0.0
        %530 = vmatmul.mubr.f32.gmra.mrb[0].mxu0 %v463
        %v531 = vpop.f32.mrb[0].mxu0
        %v532 = vadd.f32 %v459, %v531
        %v533 = vpop.f32.mrb[0].mxu0
        %v534 = vadd.f32 %v459, %v533
        %535 = vdwg.mxu0
        %536 = vmatprep.subr.mxu0 0.0
        %537 = vmatpush1.msra.mxu0 %v430
        %538 = vmatprep.subr.mxu0 0.0
        %539 = vmatpush1.msra.mxu0 %v433
        %540 = vmatprep.subr.mxu0 0.0
        %541 = vmatpush1.msra.mxu0 %v436
        %542 = vmatprep.subr.mxu0 0.0
        %543 = vmatpush1.msra.mxu0 %v439
        %544 = vmatprep.subr.mxu0 0.0
        %545 = vmatpush1.msra.mxu0 %v442
        %546 = vmatprep.subr.mxu0 0.0
        %547 = vmatpush1.msra.mxu0 %v445
        %548 = vmatprep.subr.mxu0 0.0
        %549 = vmatpush1.msra.mxu0 %v448
        %550 = vmatprep.subr.mxu0 0.0
        %551 = vmatpush1.msra.mxu0 %v451
        %552 = vmatprep.subr.mxu0 0.0
        %553 = vmatpush1.msra.mxu0 %v454
        %554 = vmatprep.subr.mxu0 0.0
        %555 = vmatpush1.msra.mxu0 0.0
        %556 = vmatprep.subr.mxu0 0.0
        %557 = vmatpush1.msra.mxu0 0.0
        %558 = vmatprep.subr.mxu0 0.0
        %559 = vmatpush1.msra.mxu0 0.0
        %560 = vmatprep.subr.mxu0 0.0
        %561 = vmatpush1.msra.mxu0 0.0
        %562 = vmatprep.subr.mxu0 0.0
        %563 = vmatpush1.msra.mxu0 0.0
        %564 = vmatprep.subr.mxu0 0.0
        %565 = vmatpush1.msra.mxu0 0.0
        %566 = vmatprep.subr.mxu0 0.0
        %567 = vmatpush1.msra.mxu0 0.0
        %568 = vmatprep.subr.mxu0 0.0
        %569 = vmatpush1.msra.mxu0 0.0
        %570 = vmatprep.subr.mxu0 0.0
        %571 = vmatpush1.msra.mxu0 0.0
        %572 = vmatprep.subr.mxu0 0.0
        %573 = vmatpush1.msra.mxu0 0.0
        %574 = vmatprep.subr.mxu0 0.0
        %575 = vmatpush1.msra.mxu0 0.0
        %576 = vmatprep.subr.mxu0 0.0
        %577 = vmatpush1.msra.mxu0 0.0
        %578 = vmatprep.subr.mxu0 0.0
        %579 = vmatpush1.msra.mxu0 0.0
        %580 = vmatprep.subr.mxu0 0.0
        %581 = vmatpush1.msra.mxu0 0.0
        %582 = vmatprep.subr.mxu0 0.0
        %583 = vmatpush1.msra.mxu0 0.0
        %584 = vmatprep.subr.mxu0 0.0
        %585 = vmatpush1.msra.mxu0 0.0
        %586 = vmatprep.subr.mxu0 0.0
        %587 = vmatpush1.msra.mxu0 0.0
        %588 = vmatprep.subr.mxu0 0.0
        %589 = vmatpush1.msra.mxu0 0.0
        %590 = vmatprep.subr.mxu0 0.0
        %591 = vmatpush1.msra.mxu0 0.0
        %592 = vmatprep.subr.mxu0 0.0
        %593 = vmatpush1.msra.mxu0 0.0
        %594 = vmatprep.subr.mxu0 0.0
        %595 = vmatpush1.msra.mxu0 0.0
        %596 = vmatprep.subr.mxu0 0.0
        %597 = vmatpush1.msra.mxu0 0.0
        %598 = vmatprep.subr.mxu0 0.0
        %599 = vmatpush1.msra.mxu0 0.0
        %600 = vmatprep.mubr.f32.mxu0 0.0
        %601 = vmatmul.mubr.f32.gmra.mrb[0].mxu0 %v463
        %v602 = vpop.f32.mrb[0].mxu0
        %v603 = vadd.f32 %v459, %v602
        %v604 = vpop.f32.mrb[0].mxu0
        %605 = vdwg.mxu0
        %606 = vst [vmem:[%s241] sm:$0xff] %v532
        %607 = vst [vmem:[%s241 + $0x8] sm:$0xff] %v534
        %608 = vst.msk [vmem:[%s241 + $0x10] sm:$0xff] %vm257, %v603
        %v609 = vld [vmem:[%s3] sm:$0x7]
        %v611 = vlaneseq
        %v612 = vshrl.u32 %v611, 7
        %v613 = vsub.s32 0, %v612
        %v614 = vrot.slane %v609, %v613
        %v615 = vlaneseq
        %v616 = vshrl.u32 %v615, 7
        %v617 = vsub.s32 1, %v616
        %v618 = vrot.slane %v609, %v617
        %v619 = vlaneseq
        %v620 = vshrl.u32 %v619, 7
        %v621 = vsub.s32 2, %v620
        %v622 = vrot.slane %v609, %v621
        %v626 = vmul.f32 %v532, %v614
        %v627 = vmul.f32 %v534, %v618
        %v628 = vmul.f32 %v603, %v622
        %v629 = vadd.f32 %v626, %v627
        %v630 = vsel %vm257, %v628, 0.0
        %v631 = vadd.f32 %v629, %v630
        %632 = vadd.xlane.f32.xlu0 %v631
        %v633 = vpop.xlane.xlu0 %632
        %vm634 = vcmask 7168
        %635 = vst.msk [vmem:[%s251] sm:$0xff] %vm634, %v633
        %v636 = vmul.f32 %v626, %v626
        %v637 = vmul.f32 %v627, %v627
        %v638 = vmul.f32 %v628, %v628
        %v639 = vadd.f32 %v636, %v637
        %v640 = vsel %vm257, %v638, 0.0
        %v641 = vadd.f32 %v639, %v640
        %642 = vadd.xlane.f32.xlu0 %v641
        %v643 = vpop.xlane.xlu0 %642
        %vm644 = vcmask 15368
        %645 = vst.msk [vmem:[%s251] sm:$0xff] %vm644, %v643
        %s646 = sand.u32 %s120, 1
        %s647 = scalar_lea.sflag [#allocation5], %s646
        %s648 = sand.u32 %s120, 1
        %s649 = smul.addr %s648, 24
        %s650 = scalar_lea.vmem [#allocation6], %s649
        %p651 = scmp.lt.s32.totalorder %s23, 1
        %s652 = scalar_select %p651, %s23, 1
        %s653 = smul.addr %s652, 8
        %s654 = scalar_lea.vmem %s5, %s653
        // Predicated region
        $region41: #{tpu_custom_call.1} parent=35 // pred_check
          %p655 = pneg %p130
        $region42: #{tpu_custom_call.1} parent=35 // pred_check_branch
          %657 = sbr.rel (%p655) target = $region44
        $region43: #{tpu_custom_call.1} parent=35 // pred_region
          %s659 = ssub.s32 384, 384
          %660 = vsyncadd %s647, %s659
          %s661 = smul.addr %s23, 3
          %s662 = smul.addr %s661, 128
          %s663 = scalar_lea.hbm %s4, %s662
          %s665 = sshll.u32 %s650, 4
          %s666 = int_to_ptr.vmem [resolvable:$true] %s665
          %668 = dma.vmem_to_hbm [thread:$0]  %s666, 384, %s663, %s647
        $region44: #{tpu_custom_call.1} parent=35 // pred_fallthru
          _
        // Predicated region
        $region45: #{tpu_custom_call.1} parent=35 // pred_check
          %p669 = pneg %p156
        $region46: #{tpu_custom_call.1} parent=35 // pred_check_branch
          %671 = sbr.rel (%p669) target = $region48
        $region47: #{tpu_custom_call.1} parent=35 // pred_region
          _
        $region48: #{tpu_custom_call.1} parent=35 // pred_fallthru
          _
      $region36: #{tpu_custom_call.1} parent=5 // pred_fallthru
        _
      %p672 = scmp.le.s32.totalorder 2, %s18
      // Predicated region
      $region49: #{tpu_custom_call.1} parent=5 // pred_check
        %p673 = pneg %p672
      $region50: #{tpu_custom_call.1} parent=5 // pred_check_branch
        %675 = sbr.rel (%p673) target = $region52
      $region51: #{tpu_custom_call.1} parent=5 // pred_region
        %s676 = ssub.s32 %s18, 2
        // Predicated region
        $region53: #{tpu_custom_call.1} parent=51 // pred_check
          %p677 = pneg %p136
        $region54: #{tpu_custom_call.1} parent=51 // pred_check_branch
          %679 = sbr.rel (%p677) target = $region56
        $region55: #{tpu_custom_call.1} parent=51 // pred_region
          %s680 = sand.u32 %s121, 1
          %s681 = scalar_lea.sflag [#allocation5], %s680
          %s682 = sand.u32 %s121, 1
          %s683 = smul.addr %s682, 24
          %s684 = scalar_lea.vmem [#allocation6], %s683
          %685 = dma.done %s681, 384
        $region56: #{tpu_custom_call.1} parent=51 // pred_fallthru
          _
        // Predicated region
        $region57: #{tpu_custom_call.1} parent=51 // pred_check
          %p686 = pneg %p162
        $region58: #{tpu_custom_call.1} parent=51 // pred_check_branch
          %688 = sbr.rel (%p686) target = $region60
        $region59: #{tpu_custom_call.1} parent=51 // pred_region
          %p689 = scmp.lt.s32.totalorder %s24, 1
          %s690 = scalar_select %p689, %s24, 1
          %s691 = smul.addr %s690, 8
          %s692 = scalar_lea.vmem %s5, %s691
        $region60: #{tpu_custom_call.1} parent=51 // pred_fallthru
          _
      $region52: #{tpu_custom_call.1} parent=5 // pred_fallthru
        _
    $region6: #{tpu_custom_call.1} parent=1 // loop_footer
      %s22 = sadd.s32 1, %s18
    $region7: #{tpu_custom_call.1} parent=1 // loop_footer_branch
      %17 = sbr.rel target = $region3
    $region8: #{tpu_custom_call.1} parent=1 // loop_exit
      _
    %693 = vsyncpa [#allocation4], 1
    %s694 = scalar_lea.sflag [#allocation4], 1
    %695 = vsyncpa %s694, 1
    %696 = vsyncpa [#allocation5], 1
    %s697 = scalar_lea.sflag [#allocation5], 1
    %698 = vsyncpa %s697, 1

</llo_original>
